<compile_context>
chip_gen: v6e
topology: v6e:2x2x1
jax: 0.10.0
libtpu: 0.0.40
codegen_flags: <defaults>
</compile_context>

<pallas_src>
import numpy as np
import jax
import jax.numpy as jnp
from jax.experimental import pallas as pl
from jax.experimental.pallas import tpu as pltpu


def _make_kernel(hw_total: int, hw_tile: int, n_hw: int):
    """Build the kernel body for a given total HW, HW tile size and tile count."""

    def kernel(x_ref, wc_ref, bc_ref, w1_ref, b1_ref, w2_ref, b2_ref,
               o_ref, sum_ref, max_ref):
        t = pl.program_id(1)

        @pl.when(t == 0)
        def _init():
            sum_ref[...] = jnp.zeros_like(sum_ref)
            max_ref[...] = jnp.full_like(max_ref, -jnp.inf)

        x = x_ref[0]                                          # (Cin, hw_tile)

        # 1x1 conv in NCHW orientation: (Cout, Cin) @ (Cin, hw_tile) + bias.
        # K = Cin is tiny so MXU utilization is low, but this op is HBM-bound;
        # the matmul is off the critical path.
        y = jnp.dot(wc_ref[...], x,
                    preferred_element_type=jnp.float32) + bc_ref[...]  # (Cout, hw_tile)

        # Running adaptive avg / max pool: reduce over the HW (lane) axis.
        sum_ref[...] += jnp.sum(y, axis=1, keepdims=True)     # (Cout, 1)
        max_ref[...] = jnp.maximum(max_ref[...],
                                   jnp.max(y, axis=1, keepdims=True))

        # Stash this tile into the HW-resident output block.  Unrolled static,
        # lane-aligned slices (guarded by pl.when) avoid dynamic lane indexing.
        def _stash(k):
            @pl.when(t == k)
            def _():
                o_ref[0, :, k * hw_tile:(k + 1) * hw_tile] = y.astype(o_ref.dtype)

        for k in range(n_hw):
            _stash(k)

        @pl.when(t == n_hw - 1)
        def _finalize():
            avg = sum_ref[...] * (1.0 / hw_total)             # (Cout, 1)
            mx = max_ref[...]                                 # (Cout, 1)
            cout = avg.shape[0]
            # Fuse the two pooled vectors into one 2-column MLP pass:
            # column 0 = avg branch, column 1 = max branch.
            col = jax.lax.broadcasted_iota(jnp.int32, (cout, 2), 1)
            v2 = jnp.where(col == 0, avg, mx)                 # (Cout, 2)
            h = jnp.dot(w1_ref[...], v2,
                        preferred_element_type=jnp.float32) + b1_ref[...]  # (hid, 2)
            h = jnp.maximum(h, 0.0)                           # ReLU
            z = jnp.dot(w2_ref[...], h,
                        preferred_element_type=jnp.float32) + b2_ref[...]  # (Cout, 2)
            s = jax.nn.sigmoid(z)                             # EUP exp
            att = jnp.sum(s, axis=1, keepdims=True)           # fc(avg)+fc(max), (Cout, 1)
            # Scale the whole resident (Cout, HW) block before write-back.
            o_ref[0] = (o_ref[0] * att).astype(o_ref.dtype)

    return kernel


def _pick_hw_tile(hw: int) -> int:
    """Largest multiple-of-128 divisor of hw that is <= 2048 (else full hw)."""
    if hw % 128 != 0:
        return hw
    best = 128
    for t in range(128, min(hw, 2048) + 1, 128):
        if hw % t == 0:
            best = t
    return best


def attention_module_pallas(x_nchw, params, hw_tile=None):
    """x_nchw: (B, Cin, H, W) float32 -> (B, Cout, H, W) float32 (native NCHW)."""
    wc, bc, w1, b1, w2, b2 = params          # torch-style layouts (out, in)
    B, Cin, H, W = x_nchw.shape
    Cout = wc.shape[0]
    hidden = w1.shape[0]
    HW = H * W

    if hw_tile is None:
        hw_tile = _pick_hw_tile(HW)
    assert HW % hw_tile == 0, (HW, hw_tile)
    n_hw = HW // hw_tile

    # Free reshapes of contiguous trailing dims -- no transposes, no HBM passes.
    x = x_nchw.reshape(B, Cin, HW)
    bc_c = bc.reshape(Cout, 1)
    b1_c = b1.reshape(hidden, 1)
    b2_c = b2.reshape(Cout, 1)

    weight_elems = wc.size + bc.size + w1.size + b1.size + w2.size + b2.size
    cost = pl.CostEstimate(
        flops=int(2 * B * HW * Cin * Cout + B * HW * Cout + 8 * B * hidden * Cout),
        transcendentals=int(2 * B * Cout),
        bytes_accessed=int(4 * (B * HW * (Cin + Cout) + weight_elems)),
    )

    # VMEM budget: double-buffered x tile + resident output block + weights +
    # scratch, with slack.  Clamped with headroom for v7x's 64 MiB VMEM.
    vmem_bytes = 4 * (2 * Cin * hw_tile + 2 * Cout * HW + 2 * weight_elems
                      + 2 * Cout * 128)
    vmem_limit = int(min(max(2 * vmem_bytes + (4 << 20), 8 << 20), 48 << 20))

    out = pl.pallas_call(
        _make_kernel(HW, hw_tile, n_hw),
        out_shape=jax.ShapeDtypeStruct((B, Cout, HW), jnp.float32),
        grid_spec=pltpu.PrefetchScalarGridSpec(
            num_scalar_prefetch=0,
            grid=(B, n_hw),
            in_specs=[
                pl.BlockSpec((1, Cin, hw_tile), lambda b, t: (b, 0, t)),  # x tile
                pl.BlockSpec((Cout, Cin), lambda b, t: (0, 0)),           # conv W
                pl.BlockSpec((Cout, 1), lambda b, t: (0, 0)),             # conv b
                pl.BlockSpec((hidden, Cout), lambda b, t: (0, 0)),        # fc1 W
                pl.BlockSpec((hidden, 1), lambda b, t: (0, 0)),           # fc1 b
                pl.BlockSpec((Cout, hidden), lambda b, t: (0, 0)),        # fc2 W
                pl.BlockSpec((Cout, 1), lambda b, t: (0, 0)),             # fc2 b
            ],
            out_specs=pl.BlockSpec((1, Cout, HW), lambda b, t: (b, 0, 0)),
            scratch_shapes=[pltpu.VMEM((Cout, 1), jnp.float32),   # running sum
                            pltpu.VMEM((Cout, 1), jnp.float32)],  # running max
        ),
        compiler_params=pltpu.CompilerParams(
            dimension_semantics=("parallel", "arbitrary"),
            vmem_limit_bytes=vmem_limit,
        ),
        cost_estimate=cost,
    )(x, wc, bc_c, w1, b1_c, w2, b2_c)

    return out.reshape(B, Cout, H, W)


def _reference(x_nchw, params):
    """Plain-JAX reference matching the PyTorch forward semantics (NCHW)."""
    wc, bc, w1, b1, w2, b2 = params
    y = jnp.einsum("oc,bchw->bohw", wc, x_nchw) + bc[None, :, None, None]
    avg = jnp.mean(y, axis=(2, 3))                            # (B, Cout)
    mx = jnp.max(y, axis=(2, 3))                              # (B, Cout)

    def fc(v):
        h = jnp.maximum(v @ w1.T + b1, 0.0)
        return jax.nn.sigmoid(h @ w2.T + b2)

    att = fc(avg) + fc(mx)                                    # (B, Cout)
    return y * att[:, :, None, None]


def make_params(key, in_channels, out_channels, reduction_ratio=16):
    hidden = out_channels // reduction_ratio
    ks = jax.random.split(key, 6)
    # PyTorch-style (out, in) layouts; synthetic init.
    wc = jax.random.normal(ks[0], (out_channels, in_channels), jnp.float32) * 0.1
    bc = jax.random.normal(ks[1], (out_channels,), jnp.float32) * 0.1
    w1 = jax.random.normal(ks[2], (hidden, out_channels), jnp.float32) * 0.1
    b1 = jax.random.normal(ks[3], (hidden,), jnp.float32) * 0.1
    w2 = jax.random.normal(ks[4], (out_channels, hidden), jnp.float32) * 0.1
    b2 = jax.random.normal(ks[5], (out_channels,), jnp.float32) * 0.1
    return (wc, bc, w1, b1, w2, b2)


if __name__ == "__main__":
    B, Cin, H, W = 2, 4, 16, 16
    Cout, reduction = 32, 16   # hidden = 2

    key = jax.random.PRNGKey(0)
    kx, kp = jax.random.split(key)
    x = jax.random.normal(kx, (B, Cin, H, W), jnp.float32)
    params = make_params(kp, Cin, Cout, reduction)

    ref = jax.block_until_ready(_reference(x, params))

    # Exercise both the multi-tile HW reduction path (hw_tile=128 -> grid (2,2))
    # and the auto single-tile path.
    for tile in (128, None):
        out = jax.block_until_ready(attention_module_pallas(x, params, hw_tile=tile))
        assert out.shape == (B, Cout, H, W)
        np.testing.assert_allclose(np.asarray(out), np.asarray(ref),
                                   rtol=1e-5, atol=1e-5)

    print("KERNEL_OK")
</pallas_src>

<mosaic_0001>
module attributes {stable_mosaic.version = 11 : i64} {
  func.func @kernel(%arg0: i32, %arg1: i32, %arg2: memref<1x4x128xf32, #tpu.memory_space<vmem>>, %arg3: memref<32x4xf32, #tpu.memory_space<vmem>>, %arg4: memref<32x1xf32, #tpu.memory_space<vmem>>, %arg5: memref<2x32xf32, #tpu.memory_space<vmem>>, %arg6: memref<2x1xf32, #tpu.memory_space<vmem>>, %arg7: memref<32x2xf32, #tpu.memory_space<vmem>>, %arg8: memref<32x1xf32, #tpu.memory_space<vmem>>, %arg9: memref<1x32x256xf32, #tpu.memory_space<vmem>>, %arg10: memref<32x1xf32, #tpu.memory_space<vmem>>, %arg11: memref<32x1xf32, #tpu.memory_space<vmem>>) attributes {dimension_semantics = [#tpu.dimension_semantics<parallel>, #tpu.dimension_semantics<arbitrary>], iteration_bounds = array<i64: 2, 2>, scalar_prefetch = 0 : i64, scratch_operands = 2 : i64, tpu.core_type = #tpu.core_type<tc>, window_params = [{transform_indices = @transform_0, window_bounds = array<i64: 1, 4, 128>}, {pipeline_mode = #tpu.pipeline_mode<synchronous>, transform_indices = @transform_1, window_bounds = array<i64: 32, 4>}, {pipeline_mode = #tpu.pipeline_mode<synchronous>, transform_indices = @transform_2, window_bounds = array<i64: 32, 1>}, {pipeline_mode = #tpu.pipeline_mode<synchronous>, transform_indices = @transform_3, window_bounds = array<i64: 2, 32>}, {pipeline_mode = #tpu.pipeline_mode<synchronous>, transform_indices = @transform_4, window_bounds = array<i64: 2, 1>}, {pipeline_mode = #tpu.pipeline_mode<synchronous>, transform_indices = @transform_5, window_bounds = array<i64: 32, 2>}, {pipeline_mode = #tpu.pipeline_mode<synchronous>, transform_indices = @transform_6, window_bounds = array<i64: 32, 1>}, {transform_indices = @transform_7, window_bounds = array<i64: 1, 32, 256>}]} {
    %c0_i32 = arith.constant 0 : i32
    %0 = arith.cmpi eq, %arg1, %c0_i32 : i32
    %1 = arith.extui %0 : i1 to i32
    %c0_i32_0 = arith.constant 0 : i32
    %2 = arith.cmpi ne, %1, %c0_i32_0 : i32
    scf.if %2 {
      %cst_22 = arith.constant 0.000000e+00 : f32
      %29 = vector.broadcast %cst_22 : f32 to vector<32x1xf32>
      %c0_23 = arith.constant 0 : index
      %c0_24 = arith.constant 0 : index
      %30 = vector.load %arg10[%c0_23, %c0_24] : memref<32x1xf32, #tpu.memory_space<vmem>>, vector<32x1xf32>
      tpu.vector_store %arg10[%c0_23, %c0_24], %29 {strides = array<i32>} : memref<32x1xf32, #tpu.memory_space<vmem>>, vector<32x1xf32>,
      %cst_25 = arith.constant 0xFF800000 : f32
      %31 = vector.broadcast %cst_25 : f32 to vector<32x1xf32>
      %c0_26 = arith.constant 0 : index
      %c0_27 = arith.constant 0 : index
      %32 = vector.load %arg11[%c0_26, %c0_27] : memref<32x1xf32, #tpu.memory_space<vmem>>, vector<32x1xf32>
      tpu.vector_store %arg11[%c0_26, %c0_27], %31 {strides = array<i32>} : memref<32x1xf32, #tpu.memory_space<vmem>>, vector<32x1xf32>,
    } else {
    }
    %c0 = arith.constant 0 : index
    %c0_1 = arith.constant 0 : index
    %c0_2 = arith.constant 0 : index
    %3 = vector.load %arg2[%c0, %c0_1, %c0_2] : memref<1x4x128xf32, #tpu.memory_space<vmem>>, vector<1x4x128xf32>
    %4 = vector.shape_cast %3 : vector<1x4x128xf32> to vector<4x128xf32>
    %c0_3 = arith.constant 0 : index
    %c0_4 = arith.constant 0 : index
    %5 = vector.load %arg3[%c0_3, %c0_4] : memref<32x4xf32, #tpu.memory_space<vmem>>, vector<32x4xf32>
    %cst = arith.constant dense<0.000000e+00> : vector<32x128xf32>
    %6 = tpu.matmul %5, %4, %cst {dimension_numbers = #tpu.dot_dimension_numbers<[1], [0], [0], [1], [0, 0, 1, 1], [], []>} : vector<32x4xf32>, vector<4x128xf32>, vector<32x128xf32> -> vector<32x128xf32>
    %c0_5 = arith.constant 0 : index
    %c0_6 = arith.constant 0 : index
    %7 = vector.load %arg4[%c0_5, %c0_6] : memref<32x1xf32, #tpu.memory_space<vmem>>, vector<32x1xf32>
    %8 = vector.broadcast %7 : vector<32x1xf32> to vector<32x128xf32>
    %9 = arith.addf %6, %8 : vector<32x128xf32>
    %c0_7 = arith.constant 0 : index
    %c0_8 = arith.constant 0 : index
    %10 = vector.load %arg10[%c0_7, %c0_8] : memref<32x1xf32, #tpu.memory_space<vmem>>, vector<32x1xf32>
    %cst_9 = arith.constant dense<0.000000e+00> : vector<32xf32>
    %11 = vector.multi_reduction <add>, %9, %cst_9 [1] : vector<32x128xf32> to vector<32xf32>
    %12 = vector.shape_cast %11 : vector<32xf32> to vector<32x1xf32>
    %13 = arith.addf %10, %12 : vector<32x1xf32>
    %c0_10 = arith.constant 0 : index
    %c0_11 = arith.constant 0 : index
    %14 = vector.load %arg10[%c0_10, %c0_11] : memref<32x1xf32, #tpu.memory_space<vmem>>, vector<32x1xf32>
    tpu.vector_store %arg10[%c0_10, %c0_11], %13 {strides = array<i32>} : memref<32x1xf32, #tpu.memory_space<vmem>>, vector<32x1xf32>,
    %c0_12 = arith.constant 0 : index
    %c0_13 = arith.constant 0 : index
    %15 = vector.load %arg11[%c0_12, %c0_13] : memref<32x1xf32, #tpu.memory_space<vmem>>, vector<32x1xf32>
    %cst_14 = arith.constant dense<0xFF800000> : vector<32xf32>
    %16 = vector.multi_reduction <maximumf>, %9, %cst_14 [1] : vector<32x128xf32> to vector<32xf32>
    %17 = vector.shape_cast %16 : vector<32xf32> to vector<32x1xf32>
    %18 = arith.maximumf %15, %17 : vector<32x1xf32>
    %c0_15 = arith.constant 0 : index
    %c0_16 = arith.constant 0 : index
    %19 = vector.load %arg11[%c0_15, %c0_16] : memref<32x1xf32, #tpu.memory_space<vmem>>, vector<32x1xf32>
    tpu.vector_store %arg11[%c0_15, %c0_16], %18 {strides = array<i32>} : memref<32x1xf32, #tpu.memory_space<vmem>>, vector<32x1xf32>,
    %c0_i32_17 = arith.constant 0 : i32
    %20 = arith.cmpi eq, %arg1, %c0_i32_17 : i32
    %21 = arith.extui %20 : i1 to i32
    %c0_i32_18 = arith.constant 0 : i32
    %22 = arith.cmpi ne, %21, %c0_i32_18 : i32
    scf.if %22 {
      %c0_22 = arith.constant 0 : index
      %c0_23 = arith.constant 0 : index
      %c0_24 = arith.constant 0 : index
      %29 = vector.load %arg9[%c0_22, %c0_23, %c0_24] : memref<1x32x256xf32, #tpu.memory_space<vmem>>, vector<1x32x128xf32>
      %30 = vector.shape_cast %29 : vector<1x32x128xf32> to vector<32x128xf32>
      %31 = vector.shape_cast %9 : vector<32x128xf32> to vector<1x32x128xf32>
      tpu.vector_store %arg9[%c0_22, %c0_23, %c0_24], %31 {strides = array<i32>} : memref<1x32x256xf32, #tpu.memory_space<vmem>>, vector<1x32x128xf32>,
    } else {
    }
    %c1_i32 = arith.constant 1 : i32
    %23 = arith.cmpi eq, %arg1, %c1_i32 : i32
    %24 = arith.extui %23 : i1 to i32
    %c0_i32_19 = arith.constant 0 : i32
    %25 = arith.cmpi ne, %24, %c0_i32_19 : i32
    scf.if %25 {
      %c0_22 = arith.constant 0 : index
      %c0_23 = arith.constant 0 : index
      %c128 = arith.constant 128 : index
      %29 = vector.load %arg9[%c0_22, %c0_23, %c128] : memref<1x32x256xf32, #tpu.memory_space<vmem>>, vector<1x32x128xf32>
      %30 = vector.shape_cast %29 : vector<1x32x128xf32> to vector<32x128xf32>
      %31 = vector.shape_cast %9 : vector<32x128xf32> to vector<1x32x128xf32>
      tpu.vector_store %arg9[%c0_22, %c0_23, %c128], %31 {strides = array<i32>} : memref<1x32x256xf32, #tpu.memory_space<vmem>>, vector<1x32x128xf32>,
    } else {
    }
    %c1_i32_20 = arith.constant 1 : i32
    %26 = arith.cmpi eq, %arg1, %c1_i32_20 : i32
    %27 = arith.extui %26 : i1 to i32
    %c0_i32_21 = arith.constant 0 : i32
    %28 = arith.cmpi ne, %27, %c0_i32_21 : i32
    scf.if %28 {
      %c0_22 = arith.constant 0 : index
      %c0_23 = arith.constant 0 : index
      %29 = vector.load %arg10[%c0_22, %c0_23] : memref<32x1xf32, #tpu.memory_space<vmem>>, vector<32x1xf32>
      %cst_24 = arith.constant 3.906250e-03 : f32
      %30 = vector.broadcast %cst_24 : f32 to vector<32x1xf32>
      %31 = arith.mulf %29, %30 : vector<32x1xf32>
      %c0_25 = arith.constant 0 : index
      %c0_26 = arith.constant 0 : index
      %32 = vector.load %arg11[%c0_25, %c0_26] : memref<32x1xf32, #tpu.memory_space<vmem>>, vector<32x1xf32>
      %33 = tpu.iota {dimensions = array<i32: 1>} : vector<32x2xi32>
      %c0_i32_27 = arith.constant 0 : i32
      %34 = vector.broadcast %c0_i32_27 : i32 to vector<32x2xi32>
      %35 = arith.cmpi eq, %33, %34 : vector<32x2xi32>
      %36 = vector.shape_cast %31 : vector<32x1xf32> to vector<32x1xf32>
      %37 = vector.broadcast %36 : vector<32x1xf32> to vector<32x2xf32>
      %38 = vector.shape_cast %32 : vector<32x1xf32> to vector<32x1xf32>
      %39 = vector.broadcast %38 : vector<32x1xf32> to vector<32x2xf32>
      %40 = arith.select %35, %37, %39 : vector<32x2xi1>, vector<32x2xf32>
      %c0_28 = arith.constant 0 : index
      %c0_29 = arith.constant 0 : index
      %41 = vector.load %arg5[%c0_28, %c0_29] : memref<2x32xf32, #tpu.memory_space<vmem>>, vector<2x32xf32>
      %cst_30 = arith.constant dense<0.000000e+00> : vector<2x2xf32>
      %42 = tpu.matmul %41, %40, %cst_30 {dimension_numbers = #tpu.dot_dimension_numbers<[1], [0], [0], [1], [0, 0, 1, 1], [], []>} : vector<2x32xf32>, vector<32x2xf32>, vector<2x2xf32> -> vector<2x2xf32>
      %c0_31 = arith.constant 0 : index
      %c0_32 = arith.constant 0 : index
      %43 = vector.load %arg6[%c0_31, %c0_32] : memref<2x1xf32, #tpu.memory_space<vmem>>, vector<2x1xf32>
      %44 = vector.broadcast %43 : vector<2x1xf32> to vector<2x2xf32>
      %45 = arith.addf %42, %44 : vector<2x2xf32>
      %cst_33 = arith.constant 0.000000e+00 : f32
      %46 = vector.broadcast %cst_33 : f32 to vector<2x2xf32>
      %47 = arith.maximumf %45, %46 : vector<2x2xf32>
      %c0_34 = arith.constant 0 : index
      %c0_35 = arith.constant 0 : index
      %48 = vector.load %arg7[%c0_34, %c0_35] : memref<32x2xf32, #tpu.memory_space<vmem>>, vector<32x2xf32>
      %cst_36 = arith.constant dense<0.000000e+00> : vector<32x2xf32>
      %49 = tpu.matmul %48, %47, %cst_36 {dimension_numbers = #tpu.dot_dimension_numbers<[1], [0], [0], [1], [0, 0, 1, 1], [], []>} : vector<32x2xf32>, vector<2x2xf32>, vector<32x2xf32> -> vector<32x2xf32>
      %c0_37 = arith.constant 0 : index
      %c0_38 = arith.constant 0 : index
      %50 = vector.load %arg8[%c0_37, %c0_38] : memref<32x1xf32, #tpu.memory_space<vmem>>, vector<32x1xf32>
      %51 = vector.broadcast %50 : vector<32x1xf32> to vector<32x2xf32>
      %52 = arith.addf %49, %51 : vector<32x2xf32>
      %53 = arith.negf %52 : vector<32x2xf32>
      %54 = math.exp %53 : vector<32x2xf32>
      %cst_39 = arith.constant 1.000000e+00 : f32
      %55 = vector.broadcast %cst_39 : f32 to vector<32x2xf32>
      %56 = arith.addf %55, %54 : vector<32x2xf32>
      %57 = arith.divf %55, %56 : vector<32x2xf32>
      %cst_40 = arith.constant dense<0.000000e+00> : vector<32xf32>
      %58 = vector.multi_reduction <add>, %57, %cst_40 [1] : vector<32x2xf32> to vector<32xf32>
      %59 = vector.shape_cast %58 : vector<32xf32> to vector<32x1xf32>
      %c0_41 = arith.constant 0 : index
      %c0_42 = arith.constant 0 : index
      %c0_43 = arith.constant 0 : index
      %60 = vector.load %arg9[%c0_41, %c0_42, %c0_43] : memref<1x32x256xf32, #tpu.memory_space<vmem>>, vector<1x32x256xf32>
      %61 = vector.shape_cast %60 : vector<1x32x256xf32> to vector<32x256xf32>
      %62 = vector.broadcast %59 : vector<32x1xf32> to vector<32x256xf32>
      %63 = arith.mulf %61, %62 : vector<32x256xf32>
      %c0_44 = arith.constant 0 : index
      %c0_45 = arith.constant 0 : index
      %c0_46 = arith.constant 0 : index
      %64 = vector.load %arg9[%c0_44, %c0_45, %c0_46] : memref<1x32x256xf32, #tpu.memory_space<vmem>>, vector<1x32x256xf32>
      %65 = vector.shape_cast %64 : vector<1x32x256xf32> to vector<32x256xf32>
      %66 = vector.shape_cast %63 : vector<32x256xf32> to vector<1x32x256xf32>
      tpu.vector_store %arg9[%c0_44, %c0_45, %c0_46], %66 {strides = array<i32>} : memref<1x32x256xf32, #tpu.memory_space<vmem>>, vector<1x32x256xf32>,
    } else {
    }
    return
  }
  func.func @transform_0(%arg0: i32, %arg1: i32) -> (i32, i32, i32) {
    %c0_i32 = arith.constant 0 : i32
    %c0_i32_0 = arith.constant 0 : i32
    return %arg0, %c0_i32, %arg1 : i32, i32, i32
  }
  func.func @transform_1(%arg0: i32, %arg1: i32) -> (i32, i32) {
    %c0_i32 = arith.constant 0 : i32
    %c0_i32_0 = arith.constant 0 : i32
    %c0_i32_1 = arith.constant 0 : i32
    return %c0_i32, %c0_i32_0 : i32, i32
  }
  func.func @transform_2(%arg0: i32, %arg1: i32) -> (i32, i32) {
    %c0_i32 = arith.constant 0 : i32
    %c0_i32_0 = arith.constant 0 : i32
    %c0_i32_1 = arith.constant 0 : i32
    return %c0_i32, %c0_i32_0 : i32, i32
  }
  func.func @transform_3(%arg0: i32, %arg1: i32) -> (i32, i32) {
    %c0_i32 = arith.constant 0 : i32
    %c0_i32_0 = arith.constant 0 : i32
    %c0_i32_1 = arith.constant 0 : i32
    return %c0_i32, %c0_i32_0 : i32, i32
  }
  func.func @transform_4(%arg0: i32, %arg1: i32) -> (i32, i32) {
    %c0_i32 = arith.constant 0 : i32
    %c0_i32_0 = arith.constant 0 : i32
    %c0_i32_1 = arith.constant 0 : i32
    return %c0_i32, %c0_i32_0 : i32, i32
  }
  func.func @transform_5(%arg0: i32, %arg1: i32) -> (i32, i32) {
    %c0_i32 = arith.constant 0 : i32
    %c0_i32_0 = arith.constant 0 : i32
    %c0_i32_1 = arith.constant 0 : i32
    return %c0_i32, %c0_i32_0 : i32, i32
  }
  func.func @transform_6(%arg0: i32, %arg1: i32) -> (i32, i32) {
    %c0_i32 = arith.constant 0 : i32
    %c0_i32_0 = arith.constant 0 : i32
    %c0_i32_1 = arith.constant 0 : i32
    return %c0_i32, %c0_i32_0 : i32, i32
  }
  func.func @transform_7(%arg0: i32, %arg1: i32) -> (i32, i32, i32) {
    %c0_i32 = arith.constant 0 : i32
    %c0_i32_0 = arith.constant 0 : i32
    %c0_i32_1 = arith.constant 0 : i32
    return %arg0, %c0_i32, %c0_i32_0 : i32, i32, i32
  }
}

</mosaic_0001>

<llo_original>
// kernel: tpu_custom_call.1
$region0: #{tpu_custom_call.1}
  #allocation0 [shape = 'u32[]', space=smem, size = 0x4, offset = 0x4, fixed_abs, tag = 'smem constant byte address 0x4 - core index']
  #allocation1 [shape = 'u32[144,128]{1,0:T(1,128)}', space=vmem, size = 0x12000, scoped, tag = 'internal scratch']
  #allocation2 [shape = 'f32[32,1]{1,0:T(8,128)}', space=vmem, size = 0x4000, scoped, tag = 'scratch operand']
  #allocation3 [shape = 'f32[32,1]{1,0:T(8,128)}', space=vmem, size = 0x4000, scoped, tag = 'scratch operand']
  %s0 = inlined_call_operand.vmem [shape: f32[2,4,256], index: 0, kind: input, shape index: {}]
  %s1 = inlined_call_operand.vmem [shape: f32[32,4], index: 1, kind: input, shape index: {}]
  %s2 = inlined_call_operand.vmem [shape: f32[32,1], index: 2, kind: input, shape index: {}]
  %s3 = inlined_call_operand.vmem [shape: f32[2,32], index: 3, kind: input, shape index: {}]
  %s4 = inlined_call_operand.vmem [shape: f32[2,1], index: 4, kind: input, shape index: {}]
  %s5 = inlined_call_operand.vmem [shape: f32[32,2], index: 5, kind: input, shape index: {}]
  %s6 = inlined_call_operand.vmem [shape: f32[32,1], index: 6, kind: input, shape index: {}]
  %s7 = inlined_call_operand.hbm [shape: f32[2,32,256], index: 7, kind: output, shape index: {}]
  %s8 = sld [smem:[#allocation0]]
  $region73: #{tpu_custom_call.1} parent=0
    _
  %s10 = ssub.s32 1, %s8
  %s11 = scalar_select 0, %s10, %s8
  $region1: #{tpu_custom_call.1} parent=0
    #allocation4 [shape = 'u8[65536]{0}', space=vmem, size = 0x10000, scoped, tag = 'output window, operand 0']
    #allocation5 [shape = 's32[2]{0}', space=sflag, size = 0x8, scoped, tag = 'scoped memory for tpu_custom_call.1']
    %12 = vsyncpa [#allocation5], 0
    %s13 = scalar_lea.sflag [#allocation5], 1
    %14 = vsyncpa %s13, 0
    loop: start=0, step=1, limit=6
    $region2: #{tpu_custom_call.1} parent=1 // loop_pre_header
      _
    $region3: #{tpu_custom_call.1} parent=1 // loop_header
      %s16 = sphi 0, %s20
      %p17 = scmp.ge.s32.totalorder %s16, 6
      %s23 = sphi 0, %s35
      %s24 = sphi 0, %s31
      %s25 = sphi 0, %s23
      %s26 = sphi 0, %s24
      %s27 = sphi 0, %s25
      %s28 = sphi 0, %s26
      %s40 = sphi 0, %s42
      %s43 = sphi 0, %s40
      %s44 = sphi 0, %s43
      %s60 = sphi 0, %s44
      %s64 = sphi 0, %s64
      %s66 = sphi 0, %s64
      %s67 = sphi 0, %s66
      %s81 = sphi 0, %s67
      %s85 = sphi 0, %s85
      %s87 = sphi 0, %s85
      %s88 = sphi 0, %s87
      %s102 = sphi 0, %s88
      %s106 = sphi 0, %s106
      %s108 = sphi 0, %s106
      %s109 = sphi 0, %s108
      %s123 = sphi 0, %s109
      %s127 = sphi 0, %s127
      %s129 = sphi 0, %s127
      %s130 = sphi 0, %s129
      %s144 = sphi 0, %s130
      %s148 = sphi 0, %s148
      %s150 = sphi 0, %s148
      %s151 = sphi 0, %s150
      %s165 = sphi 0, %s151
      %s169 = sphi 0, %s169
      %s171 = sphi 0, %s169
      %s172 = sphi 0, %s171
      %s186 = sphi 0, %s172
      %s192 = sphi 0, %s194
      %s195 = sphi 0, %s192
      %s196 = sphi 0, %s195
      %s212 = sphi 0, %s196
    $region4: #{tpu_custom_call.1} parent=1 // loop_header_branch
      %19 = sbr.rel (%p17) target = $region8
    $region5: #{tpu_custom_call.1} parent=1 // loop_body
      %s21 = ssub.s32 %s16, 1
      %s22 = ssub.s32 %s16, 2
      %s29 = sadd.s32 1, %s24
      %p30 = scmp.ge.s32.totalorder %s29, 2
      %s31 = scalar_select %p30, 0, %s29
      %s32 = sadd.s32 1, %s23
      %s33 = scalar_select %p30, %s32, %s23
      %p34 = scmp.ge.s32.totalorder %s33, 2
      %s35 = scalar_select %p34, 0, %s33
      %s36 = ssub.s32 %s23, %s35
      %s37 = ssub.s32 %s24, %s31
      %s38 = sor.u32 %s36, %s37
      %p39 = scmp.eq.s32.totalorder %s38, 0
      %s41 = sadd.s32 %s40, 1
      %s42 = scalar_select %p39, %s40, %s41
      %p45 = pneg %p39
      %p46 = scmp.eq.s32.totalorder %s16, 3
      %p47 = por %p45, %p46
      %p48 = scmp.ne.s32.totalorder %s40, %s43
      %p49 = scmp.eq.s32.totalorder %s16, 0
      %p50 = por %p48, %p49
      %p51 = scmp.ne.s32.totalorder %s40, %s43
      %p52 = scmp.eq.s32.totalorder %s21, 3
      %p53 = por %p51, %p52
      %p54 = scmp.ne.s32.totalorder %s43, %s44
      %p55 = scmp.eq.s32.totalorder %s21, 0
      %p56 = por %p54, %p55
      %p57 = scmp.ne.s32.totalorder %s43, %s44
      %p58 = scmp.eq.s32.totalorder %s22, 3
      %p59 = por %p57, %p58
      %p61 = scmp.ne.s32.totalorder %s44, %s60
      %p62 = scmp.eq.s32.totalorder %s22, 0
      %p63 = por %p61, %p62
      %s65 = sadd.s32 %s64, 1
      %p68 = scmp.eq.s32.totalorder %s16, 3
      %p69 = scmp.ne.s32.totalorder %s64, %s66
      %p70 = scmp.eq.s32.totalorder %s16, 0
      %p71 = por %p69, %p70
      %p72 = scmp.ne.s32.totalorder %s64, %s66
      %p73 = scmp.eq.s32.totalorder %s21, 3
      %p74 = por %p72, %p73
      %p75 = scmp.ne.s32.totalorder %s66, %s67
      %p76 = scmp.eq.s32.totalorder %s21, 0
      %p77 = por %p75, %p76
      %p78 = scmp.ne.s32.totalorder %s66, %s67
      %p79 = scmp.eq.s32.totalorder %s22, 3
      %p80 = por %p78, %p79
      %p82 = scmp.ne.s32.totalorder %s67, %s81
      %p83 = scmp.eq.s32.totalorder %s22, 0
      %p84 = por %p82, %p83
      %s86 = sadd.s32 %s85, 1
      %p89 = scmp.eq.s32.totalorder %s16, 3
      %p90 = scmp.ne.s32.totalorder %s85, %s87
      %p91 = scmp.eq.s32.totalorder %s16, 0
      %p92 = por %p90, %p91
      %p93 = scmp.ne.s32.totalorder %s85, %s87
      %p94 = scmp.eq.s32.totalorder %s21, 3
      %p95 = por %p93, %p94
      %p96 = scmp.ne.s32.totalorder %s87, %s88
      %p97 = scmp.eq.s32.totalorder %s21, 0
      %p98 = por %p96, %p97
      %p99 = scmp.ne.s32.totalorder %s87, %s88
      %p100 = scmp.eq.s32.totalorder %s22, 3
      %p101 = por %p99, %p100
      %p103 = scmp.ne.s32.totalorder %s88, %s102
      %p104 = scmp.eq.s32.totalorder %s22, 0
      %p105 = por %p103, %p104
      %s107 = sadd.s32 %s106, 1
      %p110 = scmp.eq.s32.totalorder %s16, 3
      %p111 = scmp.ne.s32.totalorder %s106, %s108
      %p112 = scmp.eq.s32.totalorder %s16, 0
      %p113 = por %p111, %p112
      %p114 = scmp.ne.s32.totalorder %s106, %s108
      %p115 = scmp.eq.s32.totalorder %s21, 3
      %p116 = por %p114, %p115
      %p117 = scmp.ne.s32.totalorder %s108, %s109
      %p118 = scmp.eq.s32.totalorder %s21, 0
      %p119 = por %p117, %p118
      %p120 = scmp.ne.s32.totalorder %s108, %s109
      %p121 = scmp.eq.s32.totalorder %s22, 3
      %p122 = por %p120, %p121
      %p124 = scmp.ne.s32.totalorder %s109, %s123
      %p125 = scmp.eq.s32.totalorder %s22, 0
      %p126 = por %p124, %p125
      %s128 = sadd.s32 %s127, 1
      %p131 = scmp.eq.s32.totalorder %s16, 3
      %p132 = scmp.ne.s32.totalorder %s127, %s129
      %p133 = scmp.eq.s32.totalorder %s16, 0
      %p134 = por %p132, %p133
      %p135 = scmp.ne.s32.totalorder %s127, %s129
      %p136 = scmp.eq.s32.totalorder %s21, 3
      %p137 = por %p135, %p136
      %p138 = scmp.ne.s32.totalorder %s129, %s130
      %p139 = scmp.eq.s32.totalorder %s21, 0
      %p140 = por %p138, %p139
      %p141 = scmp.ne.s32.totalorder %s129, %s130
      %p142 = scmp.eq.s32.totalorder %s22, 3
      %p143 = por %p141, %p142
      %p145 = scmp.ne.s32.totalorder %s130, %s144
      %p146 = scmp.eq.s32.totalorder %s22, 0
      %p147 = por %p145, %p146
      %s149 = sadd.s32 %s148, 1
      %p152 = scmp.eq.s32.totalorder %s16, 3
      %p153 = scmp.ne.s32.totalorder %s148, %s150
      %p154 = scmp.eq.s32.totalorder %s16, 0
      %p155 = por %p153, %p154
      %p156 = scmp.ne.s32.totalorder %s148, %s150
      %p157 = scmp.eq.s32.totalorder %s21, 3
      %p158 = por %p156, %p157
      %p159 = scmp.ne.s32.totalorder %s150, %s151
      %p160 = scmp.eq.s32.totalorder %s21, 0
      %p161 = por %p159, %p160
      %p162 = scmp.ne.s32.totalorder %s150, %s151
      %p163 = scmp.eq.s32.totalorder %s22, 3
      %p164 = por %p162, %p163
      %p166 = scmp.ne.s32.totalorder %s151, %s165
      %p167 = scmp.eq.s32.totalorder %s22, 0
      %p168 = por %p166, %p167
      %s170 = sadd.s32 %s169, 1
      %p173 = scmp.eq.s32.totalorder %s16, 3
      %p174 = scmp.ne.s32.totalorder %s169, %s171
      %p175 = scmp.eq.s32.totalorder %s16, 0
      %p176 = por %p174, %p175
      %p177 = scmp.ne.s32.totalorder %s169, %s171
      %p178 = scmp.eq.s32.totalorder %s21, 3
      %p179 = por %p177, %p178
      %p180 = scmp.ne.s32.totalorder %s171, %s172
      %p181 = scmp.eq.s32.totalorder %s21, 0
      %p182 = por %p180, %p181
      %p183 = scmp.ne.s32.totalorder %s171, %s172
      %p184 = scmp.eq.s32.totalorder %s22, 3
      %p185 = por %p183, %p184
      %p187 = scmp.ne.s32.totalorder %s172, %s186
      %p188 = scmp.eq.s32.totalorder %s22, 0
      %p189 = por %p187, %p188
      %s190 = ssub.s32 %s23, %s35
      %p191 = scmp.eq.s32.totalorder %s190, 0
      %s193 = sadd.s32 %s192, 1
      %s194 = scalar_select %p191, %s192, %s193
      %p197 = pneg %p191
      %p198 = scmp.eq.s32.totalorder %s16, 3
      %p199 = por %p197, %p198
      %p200 = scmp.ne.s32.totalorder %s192, %s195
      %p201 = scmp.eq.s32.totalorder %s16, 0
      %p202 = por %p200, %p201
      %p203 = scmp.ne.s32.totalorder %s192, %s195
      %p204 = scmp.eq.s32.totalorder %s21, 3
      %p205 = por %p203, %p204
      %p206 = scmp.ne.s32.totalorder %s195, %s196
      %p207 = scmp.eq.s32.totalorder %s21, 0
      %p208 = por %p206, %p207
      %p209 = scmp.ne.s32.totalorder %s195, %s196
      %p210 = scmp.eq.s32.totalorder %s22, 3
      %p211 = por %p209, %p210
      %p213 = scmp.ne.s32.totalorder %s196, %s212
      %p214 = scmp.eq.s32.totalorder %s22, 0
      %p215 = por %p213, %p214
      %p216 = scmp.le.s32.totalorder 1, %s16
      %p217 = scmp.lt.s32.totalorder %s16, 5
      %p218 = pnand %p216, %p217
      %p219 = pneg %p218
      // Predicated region
      $region9: #{tpu_custom_call.1} parent=5 // pred_check
        _
      $region10: #{tpu_custom_call.1} parent=5 // pred_check_branch
        %221 = sbr.rel (%p218) target = $region12
      $region11: #{tpu_custom_call.1} parent=5 // pred_region
        %s222 = ssub.s32 %s16, 1
        // Predicated region
        $region13: #{tpu_custom_call.1} parent=11 // pred_check
          %p223 = pneg %p77
        $region14: #{tpu_custom_call.1} parent=11 // pred_check_branch
          %225 = sbr.rel (%p223) target = $region16
        $region15: #{tpu_custom_call.1} parent=11 // pred_region
          _
        $region16: #{tpu_custom_call.1} parent=11 // pred_fallthru
          _
        // Predicated region
        $region17: #{tpu_custom_call.1} parent=11 // pred_check
          %p226 = pneg %p98
        $region18: #{tpu_custom_call.1} parent=11 // pred_check_branch
          %228 = sbr.rel (%p226) target = $region20
        $region19: #{tpu_custom_call.1} parent=11 // pred_region
          _
        $region20: #{tpu_custom_call.1} parent=11 // pred_fallthru
          _
        // Predicated region
        $region21: #{tpu_custom_call.1} parent=11 // pred_check
          %p229 = pneg %p119
        $region22: #{tpu_custom_call.1} parent=11 // pred_check_branch
          %231 = sbr.rel (%p229) target = $region24
        $region23: #{tpu_custom_call.1} parent=11 // pred_region
          _
        $region24: #{tpu_custom_call.1} parent=11 // pred_fallthru
          _
        // Predicated region
        $region25: #{tpu_custom_call.1} parent=11 // pred_check
          %p232 = pneg %p140
        $region26: #{tpu_custom_call.1} parent=11 // pred_check_branch
          %234 = sbr.rel (%p232) target = $region28
        $region27: #{tpu_custom_call.1} parent=11 // pred_region
          _
        $region28: #{tpu_custom_call.1} parent=11 // pred_fallthru
          _
        // Predicated region
        $region29: #{tpu_custom_call.1} parent=11 // pred_check
          %p235 = pneg %p161
        $region30: #{tpu_custom_call.1} parent=11 // pred_check_branch
          %237 = sbr.rel (%p235) target = $region32
        $region31: #{tpu_custom_call.1} parent=11 // pred_region
          _
        $region32: #{tpu_custom_call.1} parent=11 // pred_fallthru
          _
        // Predicated region
        $region33: #{tpu_custom_call.1} parent=11 // pred_check
          %p238 = pneg %p182
        $region34: #{tpu_custom_call.1} parent=11 // pred_check_branch
          %240 = sbr.rel (%p238) target = $region36
        $region35: #{tpu_custom_call.1} parent=11 // pred_region
          _
        $region36: #{tpu_custom_call.1} parent=11 // pred_fallthru
          _
      $region12: #{tpu_custom_call.1} parent=5 // pred_fallthru
        _
      %p241 = scmp.lt.s32.totalorder %s16, 4
      // Predicated region
      $region37: #{tpu_custom_call.1} parent=5 // pred_check
        %p242 = pneg %p241
      $region38: #{tpu_custom_call.1} parent=5 // pred_check_branch
        %244 = sbr.rel (%p242) target = $region40
      $region39: #{tpu_custom_call.1} parent=5 // pred_region
        // Predicated region
        $region41: #{tpu_custom_call.1} parent=39 // pred_check
          %p245 = pneg %p50
        $region42: #{tpu_custom_call.1} parent=39 // pred_check_branch
          %247 = sbr.rel (%p245) target = $region44
        $region43: #{tpu_custom_call.1} parent=39 // pred_region
          %p248 = scmp.lt.s32.totalorder %s23, 1
          %s249 = scalar_select %p248, %s23, 1
          %p250 = scmp.lt.s32.totalorder %s24, 1
          %s251 = scalar_select %p250, %s24, 1
          %s252 = smul.addr %s249, 2
          %s253 = sadd.s32 %s251, %s252
          %s254 = smul.addr %s253, 4
          %s255 = scalar_lea.vmem %s0, %s254
        $region44: #{tpu_custom_call.1} parent=39 // pred_fallthru
          _
      $region40: #{tpu_custom_call.1} parent=5 // pred_fallthru
        _
      %p256 = scmp.le.s32.totalorder 1, %s16
      %p257 = scmp.lt.s32.totalorder %s16, 5
      %p258 = pnand %p256, %p257
      %p259 = pneg %p258
      // Predicated region
      $region45: #{tpu_custom_call.1} parent=5 // pred_check
        _
      $region46: #{tpu_custom_call.1} parent=5 // pred_check_branch
        %261 = sbr.rel (%p258) target = $region48
      $region47: #{tpu_custom_call.1} parent=5 // pred_region
        %s262 = ssub.s32 %s16, 1
        %p263 = scmp.lt.s32.totalorder %s25, 1
        %s264 = scalar_select %p263, %s25, 1
        %p265 = scmp.lt.s32.totalorder %s26, 1
        %s266 = scalar_select %p265, %s26, 1
        %s267 = smul.addr %s264, 2
        %s268 = sadd.s32 %s266, %s267
        %s269 = smul.addr %s268, 4
        %s270 = scalar_lea.vmem %s0, %s269
        %p271 = pneg %p56
        %p272 = pneg %p53
        %p273 = pneg %p77
        %p274 = pneg %p74
        %p275 = pneg %p98
        %p276 = pneg %p95
        %p277 = pneg %p119
        %p278 = pneg %p116
        %p279 = pneg %p140
        %p280 = pneg %p137
        %p281 = pneg %p161
        %p282 = pneg %p158
        %p283 = pneg %p182
        %p284 = pneg %p179
        %p285 = pneg %p208
        %p286 = pneg %p205
        %s287 = sand.u32 %s195, 1
        %s288 = scalar_lea.sflag [#allocation5], %s287
        %s289 = sand.u32 %s195, 1
        %s290 = smul.addr %s289, 64
        %s291 = scalar_lea.vmem [#allocation4], %s290
        %p292 = scmp.lt.s32.totalorder %s25, 1
        %s293 = scalar_select %p292, %s25, 1
        %p294 = scmp.lt.s32.totalorder %s26, 1
        %s295 = scalar_select %p294, %s26, 1
        %s296 = smul.addr %s293, 2
        %s297 = sadd.s32 %s295, %s296
        %s298 = smul.addr %s297, 4
        %s299 = scalar_lea.vmem %s0, %s298
        %p300 = scmp.eq.s32.totalorder %s26, 0
        // Predicated region
        $region49: #{tpu_custom_call.1} parent=47 // pred_check
          %p301 = pneg %p300
        $region50: #{tpu_custom_call.1} parent=47 // pred_check_branch
          %303 = sbr.rel (%p301) target = $region52
        $region51: #{tpu_custom_call.1} parent=47 // pred_region
          %vm304 = vcmask 7168
          %305 = vst.msk [vmem:[#allocation2] sm:$0xff] %vm304, 0.0
          %306 = vst.msk [vmem:[#allocation2 + $0x8] sm:$0xff] %vm304, 0.0
          %307 = vst.msk [vmem:[#allocation2 + $0x10] sm:$0xff] %vm304, 0.0
          %308 = vst.msk [vmem:[#allocation2 + $0x18] sm:$0xff] %vm304, 0.0
          %309 = vst.msk [vmem:[#allocation3] sm:$0xff] %vm304, -inf
          %310 = vst.msk [vmem:[#allocation3 + $0x8] sm:$0xff] %vm304, -inf
          %311 = vst.msk [vmem:[#allocation3 + $0x10] sm:$0xff] %vm304, -inf
          %312 = vst.msk [vmem:[#allocation3 + $0x18] sm:$0xff] %vm304, -inf
        $region52: #{tpu_custom_call.1} parent=47 // pred_fallthru
          _
        %v313 = vld [vmem:[%s299] sm:$0xf]
        %v314 = vld [vmem:[%s1] sm:$0xff]
        %v315 = vld [vmem:[%s1 + $0x8] sm:$0xff]
        %v316 = vld [vmem:[%s1 + $0x10] sm:$0xff]
        %v317 = vld [vmem:[%s1 + $0x18] sm:$0xff]
        %v318 = vld [vmem:[%s2] sm:$0xff]
        %v319 = vld [vmem:[%s2 + $0x8] sm:$0xff]
        %v320 = vld [vmem:[%s2 + $0x10] sm:$0xff]
        %v321 = vld [vmem:[%s2 + $0x18] sm:$0xff]
        %323 = vset.pattern.permute.xlu0 0
        %324 = vperm.xlu0 %323, %v318
        %v325 = vpop.permute.xlu0 %324
        %328 = vset.pattern.permute.xlu0 0
        %329 = vperm.xlu0 %328, %v319
        %v330 = vpop.permute.xlu0 %329
        %333 = vset.pattern.permute.xlu0 0
        %334 = vperm.xlu0 %333, %v320
        %v335 = vpop.permute.xlu0 %334
        %338 = vset.pattern.permute.xlu0 0
        %339 = vperm.xlu0 %338, %v321
        %v340 = vpop.permute.xlu0 %339
        %vm342 = vcmask 31744
        %v344 = vsel %vm342, %v314, 0
        %v347 = vsel %vm342, %v315, 0
        %v350 = vsel %vm342, %v316, 0
        %v353 = vsel %vm342, %v317, 0
        %vm355 = vcmask 1043456
        %v357 = vsel %vm355, %v313, 0
        %359 = vmatprep.subr.mxu0 0.0
        %360 = vmatpush1.msra.mxu0 0.0
        %361 = vmatprep.subr.mxu0 0.0
        %362 = vmatpush1.msra.mxu0 0.0
        %363 = vmatprep.subr.mxu0 0.0
        %364 = vmatpush1.msra.mxu0 0.0
        %365 = vmatprep.subr.mxu0 0.0
        %366 = vmatpush1.msra.mxu0 0.0
        %367 = vmatprep.subr.mxu0 0.0
        %368 = vmatpush1.msra.mxu0 0.0
        %369 = vmatprep.subr.mxu0 0.0
        %370 = vmatpush1.msra.mxu0 0.0
        %371 = vmatprep.subr.mxu0 0.0
        %372 = vmatpush1.msra.mxu0 0.0
        %373 = vmatprep.subr.mxu0 0.0
        %374 = vmatpush1.msra.mxu0 0.0
        %375 = vmatprep.subr.mxu0 0.0
        %376 = vmatpush1.msra.mxu0 0.0
        %377 = vmatprep.subr.mxu0 0.0
        %378 = vmatpush1.msra.mxu0 0.0
        %379 = vmatprep.subr.mxu0 0.0
        %380 = vmatpush1.msra.mxu0 0.0
        %381 = vmatprep.subr.mxu0 0.0
        %382 = vmatpush1.msra.mxu0 0.0
        %383 = vmatprep.subr.mxu0 0.0
        %384 = vmatpush1.msra.mxu0 0.0
        %385 = vmatprep.subr.mxu0 0.0
        %386 = vmatpush1.msra.mxu0 0.0
        %387 = vmatprep.subr.mxu0 0.0
        %388 = vmatpush1.msra.mxu0 0.0
        %389 = vmatprep.subr.mxu0 0.0
        %390 = vmatpush1.msra.mxu0 %v357
        %391 = vmatprep.subr.mxu0 0.0
        %392 = vmatpush2.msra.mxu0 0.0
        %393 = vmatprep.subr.mxu0 0.0
        %394 = vmatpush2.msra.mxu0 0.0
        %395 = vmatprep.subr.mxu0 0.0
        %396 = vmatpush2.msra.mxu0 0.0
        %397 = vmatprep.subr.mxu0 0.0
        %398 = vmatpush2.msra.mxu0 0.0
        %399 = vmatprep.subr.mxu0 0.0
        %400 = vmatpush2.msra.mxu0 0.0
        %401 = vmatprep.subr.mxu0 0.0
        %402 = vmatpush2.msra.mxu0 0.0
        %403 = vmatprep.subr.mxu0 0.0
        %404 = vmatpush2.msra.mxu0 0.0
        %405 = vmatprep.subr.mxu0 0.0
        %406 = vmatpush2.msra.mxu0 0.0
        %407 = vmatprep.subr.mxu0 0.0
        %408 = vmatpush2.msra.mxu0 0.0
        %409 = vmatprep.subr.mxu0 0.0
        %410 = vmatpush2.msra.mxu0 0.0
        %411 = vmatprep.subr.mxu0 0.0
        %412 = vmatpush2.msra.mxu0 0.0
        %413 = vmatprep.subr.mxu0 0.0
        %414 = vmatpush2.msra.mxu0 0.0
        %415 = vmatprep.subr.mxu0 0.0
        %416 = vmatpush2.msra.mxu0 0.0
        %417 = vmatprep.subr.mxu0 0.0
        %418 = vmatpush2.msra.mxu0 0.0
        %419 = vmatprep.subr.mxu0 0.0
        %420 = vmatpush2.msra.mxu0 0.0
        %421 = vmatprep.subr.mxu0 0.0
        %422 = vmatpush2.msra.mxu0 0.0
        %423 = vmatprep.mubr.f32.mxu0 0.0
        %424 = vmatmul.mubr.f32.gmra.mxu0 %v344
        %v425 = vpop.f32.mrf.mxu0
        %v426 = vadd.f32 %v325, %v425
        %v427 = vpop.f32.mrf.mxu0
        %428 = vmatprep.mubr.f32.mxu0 0.0
        %429 = vmatmul.mubr.f32.gmra.mxu0 %v347
        %v430 = vpop.f32.mrf.mxu0
        %v431 = vadd.f32 %v330, %v430
        %v432 = vpop.f32.mrf.mxu0
        %433 = vmatprep.mubr.f32.mxu0 0.0
        %434 = vmatmul.mubr.f32.gmra.mxu0 %v350
        %v435 = vpop.f32.mrf.mxu0
        %v436 = vadd.f32 %v335, %v435
        %v437 = vpop.f32.mrf.mxu0
        %438 = vmatprep.mubr.f32.mxu0 0.0
        %439 = vmatmul.mubr.f32.gmra.mxu0 %v353
        %v440 = vpop.f32.mrf.mxu0
        %v441 = vadd.f32 %v340, %v440
        %v442 = vpop.f32.mrf.mxu0
        %443 = vdwg.mxu0
        %v444 = vld [vmem:[#allocation2] sm:$0xff]
        %v445 = vld [vmem:[#allocation2 + $0x8] sm:$0xff]
        %v446 = vld [vmem:[#allocation2 + $0x10] sm:$0xff]
        %v447 = vld [vmem:[#allocation2 + $0x18] sm:$0xff]
        %448 = vadd.xlane.f32.xlu0 %v426
        %v449 = vpop.xlane.xlu0 %448
        %450 = vadd.xlane.f32.xlu0 %v431
        %v451 = vpop.xlane.xlu0 %450
        %452 = vadd.xlane.f32.xlu0 %v436
        %v453 = vpop.xlane.xlu0 %452
        %454 = vadd.xlane.f32.xlu0 %v441
        %v455 = vpop.xlane.xlu0 %454
        %v456 = vadd.f32 %v444, %v449
        %v457 = vadd.f32 %v445, %v451
        %v458 = vadd.f32 %v446, %v453
        %v459 = vadd.f32 %v447, %v455
        %vm460 = vcmask 7168
        %461 = vst.msk [vmem:[#allocation2] sm:$0xff] %vm460, %v456
        %462 = vst.msk [vmem:[#allocation2 + $0x8] sm:$0xff] %vm460, %v457
        %463 = vst.msk [vmem:[#allocation2 + $0x10] sm:$0xff] %vm460, %v458
        %464 = vst.msk [vmem:[#allocation2 + $0x18] sm:$0xff] %vm460, %v459
        %v465 = vld [vmem:[#allocation3] sm:$0xff]
        %v466 = vld [vmem:[#allocation3 + $0x8] sm:$0xff]
        %v467 = vld [vmem:[#allocation3 + $0x10] sm:$0xff]
        %v468 = vld [vmem:[#allocation3 + $0x18] sm:$0xff]
        %469 = vmax.xlane.f32.xlu0 %v426
        %v470 = vpop.xlane.xlu0 %469
        %471 = vmax.xlane.f32.xlu0 %v431
        %v472 = vpop.xlane.xlu0 %471
        %473 = vmax.xlane.f32.xlu0 %v436
        %v474 = vpop.xlane.xlu0 %473
        %475 = vmax.xlane.f32.xlu0 %v441
        %v476 = vpop.xlane.xlu0 %475
        %v477 = vmax.f32 %v465, %v470
        %v478 = vmax.f32 %v466, %v472
        %v479 = vmax.f32 %v467, %v474
        %v480 = vmax.f32 %v468, %v476
        %481 = vst.msk [vmem:[#allocation3] sm:$0xff] %vm460, %v477
        %482 = vst.msk [vmem:[#allocation3 + $0x8] sm:$0xff] %vm460, %v478
        %483 = vst.msk [vmem:[#allocation3 + $0x10] sm:$0xff] %vm460, %v479
        %484 = vst.msk [vmem:[#allocation3 + $0x18] sm:$0xff] %vm460, %v480
        // Predicated region
        $region53: #{tpu_custom_call.1} parent=47 // pred_check
          %p485 = pneg %p300
        $region54: #{tpu_custom_call.1} parent=47 // pred_check_branch
          %487 = sbr.rel (%p485) target = $region56
        $region55: #{tpu_custom_call.1} parent=47 // pred_region
          %488 = vst [vmem:[%s291] sm:$0xff] %v426
          %489 = vst [vmem:[%s291 + $0x10] sm:$0xff] %v431
          %490 = vst [vmem:[%s291 + $0x20] sm:$0xff] %v436
          %491 = vst [vmem:[%s291 + $0x30] sm:$0xff] %v441
        $region56: #{tpu_custom_call.1} parent=47 // pred_fallthru
          _
        %p492 = scmp.eq.s32.totalorder %s26, 1
        // Predicated region
        $region57: #{tpu_custom_call.1} parent=47 // pred_check
          %p493 = pneg %p492
        $region58: #{tpu_custom_call.1} parent=47 // pred_check_branch
          %495 = sbr.rel (%p493) target = $region60
        $region59: #{tpu_custom_call.1} parent=47 // pred_region
          %496 = vst [vmem:[%s291 + $0x8] sm:$0xff] %v426
          %497 = vst [vmem:[%s291 + $0x18] sm:$0xff] %v431
          %498 = vst [vmem:[%s291 + $0x28] sm:$0xff] %v436
          %499 = vst [vmem:[%s291 + $0x38] sm:$0xff] %v441
          %v500 = vld [vmem:[#allocation2] sm:$0xff]
          %v501 = vld [vmem:[#allocation2 + $0x8] sm:$0xff]
          %v502 = vld [vmem:[#allocation2 + $0x10] sm:$0xff]
          %v503 = vld [vmem:[#allocation2 + $0x18] sm:$0xff]
          %v504 = vmul.f32 %v500, 0.00390625
          %v505 = vmul.f32 %v501, 0.00390625
          %v506 = vmul.f32 %v502, 0.00390625
          %v507 = vmul.f32 %v503, 0.00390625
          %v508 = vld [vmem:[#allocation3] sm:$0xff]
          %v509 = vld [vmem:[#allocation3 + $0x8] sm:$0xff]
          %v510 = vld [vmem:[#allocation3 + $0x10] sm:$0xff]
          %v511 = vld [vmem:[#allocation3 + $0x18] sm:$0xff]
          %v512 = vlaneseq
          %v513 = vand.u32 %v512, 127
          %vm514 = vcmp.eq.s32.totalorder %v513, 0
          %516 = vset.pattern.permute.xlu0 0
          %517 = vperm.xlu0 %516, %v504
          %v518 = vpop.permute.xlu0 %517
          %521 = vset.pattern.permute.xlu0 0
          %522 = vperm.xlu0 %521, %v505
          %v523 = vpop.permute.xlu0 %522
          %526 = vset.pattern.permute.xlu0 0
          %527 = vperm.xlu0 %526, %v506
          %v528 = vpop.permute.xlu0 %527
          %531 = vset.pattern.permute.xlu0 0
          %532 = vperm.xlu0 %531, %v507
          %v533 = vpop.permute.xlu0 %532
          %536 = vset.pattern.permute.xlu0 0
          %537 = vperm.xlu0 %536, %v508
          %v538 = vpop.permute.xlu0 %537
          %541 = vset.pattern.permute.xlu0 0
          %542 = vperm.xlu0 %541, %v509
          %v543 = vpop.permute.xlu0 %542
          %546 = vset.pattern.permute.xlu0 0
          %547 = vperm.xlu0 %546, %v510
          %v548 = vpop.permute.xlu0 %547
          %551 = vset.pattern.permute.xlu0 0
          %552 = vperm.xlu0 %551, %v511
          %v553 = vpop.permute.xlu0 %552
          %v555 = vsel %vm514, %v518, %v538
          %v556 = vsel %vm514, %v523, %v543
          %v557 = vsel %vm514, %v528, %v548
          %v558 = vsel %vm514, %v533, %v553
          %v559 = vld [vmem:[%s3] sm:$0x3]
          %v560 = vld [vmem:[%s4] sm:$0x3]
          %562 = vset.pattern.permute.xlu0 0
          %563 = vperm.xlu0 %562, %v560
          %v564 = vpop.permute.xlu0 %563
          %vm566 = vcmask 261120
          %v568 = vsel %vm566, %v559, 0
          %570 = vmatprep.subr.mxu0 0.0
          %571 = vmatpush1.msra.mxu0 0.0
          %572 = vmatprep.subr.mxu0 0.0
          %573 = vmatpush1.msra.mxu0 0.0
          %574 = vmatprep.subr.mxu0 0.0
          %575 = vmatpush1.msra.mxu0 0.0
          %576 = vmatprep.subr.mxu0 0.0
          %577 = vmatpush1.msra.mxu0 0.0
          %578 = vmatprep.subr.mxu0 0.0
          %579 = vmatpush1.msra.mxu0 0.0
          %580 = vmatprep.subr.mxu0 0.0
          %581 = vmatpush1.msra.mxu0 0.0
          %582 = vmatprep.subr.mxu0 0.0
          %583 = vmatpush1.msra.mxu0 0.0
          %584 = vmatprep.subr.mxu0 0.0
          %585 = vmatpush1.msra.mxu0 0.0
          %586 = vmatprep.subr.mxu0 0.0
          %587 = vmatpush1.msra.mxu0 0.0
          %588 = vmatprep.subr.mxu0 0.0
          %589 = vmatpush1.msra.mxu0 0.0
          %590 = vmatprep.subr.mxu0 0.0
          %591 = vmatpush1.msra.mxu0 0.0
          %592 = vmatprep.subr.mxu0 0.0
          %593 = vmatpush1.msra.mxu0 0.0
          %594 = vmatprep.subr.mxu0 0.0
          %595 = vmatpush1.msra.mxu0 %v558
          %596 = vmatprep.subr.mxu0 0.0
          %597 = vmatpush1.msra.mxu0 %v557
          %598 = vmatprep.subr.mxu0 0.0
          %599 = vmatpush1.msra.mxu0 %v556
          %600 = vmatprep.subr.mxu0 0.0
          %601 = vmatpush1.msra.mxu0 %v555
          %602 = vmatprep.subr.mxu0 0.0
          %603 = vmatpush2.msra.mxu0 0.0
          %604 = vmatprep.subr.mxu0 0.0
          %605 = vmatpush2.msra.mxu0 0.0
          %606 = vmatprep.subr.mxu0 0.0
          %607 = vmatpush2.msra.mxu0 0.0
          %608 = vmatprep.subr.mxu0 0.0
          %609 = vmatpush2.msra.mxu0 0.0
          %610 = vmatprep.subr.mxu0 0.0
          %611 = vmatpush2.msra.mxu0 0.0
          %612 = vmatprep.subr.mxu0 0.0
          %613 = vmatpush2.msra.mxu0 0.0
          %614 = vmatprep.subr.mxu0 0.0
          %615 = vmatpush2.msra.mxu0 0.0
          %616 = vmatprep.subr.mxu0 0.0
          %617 = vmatpush2.msra.mxu0 0.0
          %618 = vmatprep.subr.mxu0 0.0
          %619 = vmatpush2.msra.mxu0 0.0
          %620 = vmatprep.subr.mxu0 0.0
          %621 = vmatpush2.msra.mxu0 0.0
          %622 = vmatprep.subr.mxu0 0.0
          %623 = vmatpush2.msra.mxu0 0.0
          %624 = vmatprep.subr.mxu0 0.0
          %625 = vmatpush2.msra.mxu0 0.0
          %626 = vmatprep.subr.mxu0 0.0
          %627 = vmatpush2.msra.mxu0 0.0
          %628 = vmatprep.subr.mxu0 0.0
          %629 = vmatpush2.msra.mxu0 0.0
          %630 = vmatprep.subr.mxu0 0.0
          %631 = vmatpush2.msra.mxu0 0.0
          %632 = vmatprep.subr.mxu0 0.0
          %633 = vmatpush2.msra.mxu0 0.0
          %634 = vmatprep.mubr.f32.mxu0 0.0
          %635 = vmatmul.mubr.f32.gmra.mxu0 %v568
          %v636 = vpop.f32.mrf.mxu0
          %v637 = vadd.f32 %v564, %v636
          %v638 = vpop.f32.mrf.mxu0
          %639 = vdwg.mxu0
          %v640 = vmax.f32 %v637, 0.0
          %v641 = vld [vmem:[%s5] sm:$0xff]
          %v642 = vld [vmem:[%s5 + $0x8] sm:$0xff]
          %v643 = vld [vmem:[%s5 + $0x10] sm:$0xff]
          %v644 = vld [vmem:[%s5 + $0x18] sm:$0xff]
          %v645 = vld [vmem:[%s6] sm:$0xff]
          %v646 = vld [vmem:[%s6 + $0x8] sm:$0xff]
          %v647 = vld [vmem:[%s6 + $0x10] sm:$0xff]
          %v648 = vld [vmem:[%s6 + $0x18] sm:$0xff]
          %650 = vset.pattern.permute.xlu0 0
          %651 = vperm.xlu0 %650, %v645
          %v652 = vpop.permute.xlu0 %651
          %655 = vset.pattern.permute.xlu0 0
          %656 = vperm.xlu0 %655, %v646
          %v657 = vpop.permute.xlu0 %656
          %660 = vset.pattern.permute.xlu0 0
          %661 = vperm.xlu0 %660, %v647
          %v662 = vpop.permute.xlu0 %661
          %665 = vset.pattern.permute.xlu0 0
          %666 = vperm.xlu0 %665, %v648
          %v667 = vpop.permute.xlu0 %666
          %vm669 = vcmask 15360
          %v671 = vsel %vm669, %v641, 0
          %v674 = vsel %vm669, %v642, 0
          %v677 = vsel %vm669, %v643, 0
          %v680 = vsel %vm669, %v644, 0
          %vm682 = vcmask 1041408
          %v684 = vsel %vm682, %v640, 0
          %686 = vmatprep.subr.mxu0 0.0
          %687 = vmatpush1.msra.mxu0 0.0
          %688 = vmatprep.subr.mxu0 0.0
          %689 = vmatpush1.msra.mxu0 0.0
          %690 = vmatprep.subr.mxu0 0.0
          %691 = vmatpush1.msra.mxu0 0.0
          %692 = vmatprep.subr.mxu0 0.0
          %693 = vmatpush1.msra.mxu0 0.0
          %694 = vmatprep.subr.mxu0 0.0
          %695 = vmatpush1.msra.mxu0 0.0
          %696 = vmatprep.subr.mxu0 0.0
          %697 = vmatpush1.msra.mxu0 0.0
          %698 = vmatprep.subr.mxu0 0.0
          %699 = vmatpush1.msra.mxu0 0.0
          %700 = vmatprep.subr.mxu0 0.0
          %701 = vmatpush1.msra.mxu0 0.0
          %702 = vmatprep.subr.mxu0 0.0
          %703 = vmatpush1.msra.mxu0 0.0
          %704 = vmatprep.subr.mxu0 0.0
          %705 = vmatpush1.msra.mxu0 0.0
          %706 = vmatprep.subr.mxu0 0.0
          %707 = vmatpush1.msra.mxu0 0.0
          %708 = vmatprep.subr.mxu0 0.0
          %709 = vmatpush1.msra.mxu0 0.0
          %710 = vmatprep.subr.mxu0 0.0
          %711 = vmatpush1.msra.mxu0 0.0
          %712 = vmatprep.subr.mxu0 0.0
          %713 = vmatpush1.msra.mxu0 0.0
          %714 = vmatprep.subr.mxu0 0.0
          %715 = vmatpush1.msra.mxu0 0.0
          %716 = vmatprep.subr.mxu0 0.0
          %717 = vmatpush1.msra.mxu0 %v684
          %718 = vmatprep.subr.mxu0 0.0
          %719 = vmatpush2.msra.mxu0 0.0
          %720 = vmatprep.subr.mxu0 0.0
          %721 = vmatpush2.msra.mxu0 0.0
          %722 = vmatprep.subr.mxu0 0.0
          %723 = vmatpush2.msra.mxu0 0.0
          %724 = vmatprep.subr.mxu0 0.0
          %725 = vmatpush2.msra.mxu0 0.0
          %726 = vmatprep.subr.mxu0 0.0
          %727 = vmatpush2.msra.mxu0 0.0
          %728 = vmatprep.subr.mxu0 0.0
          %729 = vmatpush2.msra.mxu0 0.0
          %730 = vmatprep.subr.mxu0 0.0
          %731 = vmatpush2.msra.mxu0 0.0
          %732 = vmatprep.subr.mxu0 0.0
          %733 = vmatpush2.msra.mxu0 0.0
          %734 = vmatprep.subr.mxu0 0.0
          %735 = vmatpush2.msra.mxu0 0.0
          %736 = vmatprep.subr.mxu0 0.0
          %737 = vmatpush2.msra.mxu0 0.0
          %738 = vmatprep.subr.mxu0 0.0
          %739 = vmatpush2.msra.mxu0 0.0
          %740 = vmatprep.subr.mxu0 0.0
          %741 = vmatpush2.msra.mxu0 0.0
          %742 = vmatprep.subr.mxu0 0.0
          %743 = vmatpush2.msra.mxu0 0.0
          %744 = vmatprep.subr.mxu0 0.0
          %745 = vmatpush2.msra.mxu0 0.0
          %746 = vmatprep.subr.mxu0 0.0
          %747 = vmatpush2.msra.mxu0 0.0
          %748 = vmatprep.subr.mxu0 0.0
          %749 = vmatpush2.msra.mxu0 0.0
          %750 = vmatprep.mubr.f32.mxu0 0.0
          %751 = vmatmul.mubr.f32.gmra.mxu0 %v671
          %v752 = vpop.f32.mrf.mxu0
          %v753 = vadd.f32 %v652, %v752
          %v754 = vpop.f32.mrf.mxu0
          %755 = vmatprep.mubr.f32.mxu0 0.0
          %756 = vmatmul.mubr.f32.gmra.mxu0 %v674
          %v757 = vpop.f32.mrf.mxu0
          %v758 = vadd.f32 %v657, %v757
          %v759 = vpop.f32.mrf.mxu0
          %760 = vmatprep.mubr.f32.mxu0 0.0
          %761 = vmatmul.mubr.f32.gmra.mxu0 %v677
          %v762 = vpop.f32.mrf.mxu0
          %v763 = vadd.f32 %v662, %v762
          %v764 = vpop.f32.mrf.mxu0
          %765 = vmatprep.mubr.f32.mxu0 0.0
          %766 = vmatmul.mubr.f32.gmra.mxu0 %v680
          %v767 = vpop.f32.mrf.mxu0
          %v768 = vadd.f32 %v667, %v767
          %v769 = vpop.f32.mrf.mxu0
          %770 = vdwg.mxu0
          %v771 = vxor.u32 %v753, 2147483648
          %v772 = vxor.u32 %v758, 2147483648
          %v773 = vxor.u32 %v763, 2147483648
          %v774 = vxor.u32 %v768, 2147483648
          %v775 = vmul.f32 %v771, 1.442695
          %v776 = vpow.pop %v775
          %v777 = vmul.f32 %v772, 1.442695
          %v778 = vpow.pop %v777
          %v779 = vmul.f32 %v773, 1.442695
          %v780 = vpow.pop %v779
          %v781 = vmul.f32 %v774, 1.442695
          %v782 = vpow.pop %v781
          %v783 = vadd.f32 %v776, 1.0
          %v784 = vadd.f32 %v778, 1.0
          %v785 = vadd.f32 %v780, 1.0
          %v786 = vadd.f32 %v782, 1.0
          %v787 = vrcp.pop %v783
          %v788 = vmul.f32 1.0, %v787
          %v789 = vrcp.pop %v784
          %v790 = vmul.f32 1.0, %v789
          %v791 = vrcp.pop %v785
          %v792 = vmul.f32 1.0, %v791
          %v793 = vrcp.pop %v786
          %v794 = vmul.f32 1.0, %v793
          %v795 = vsel %vm669, %v788, 0.0
          %796 = vadd.xlane.f32.xlu0 %v795
          %v797 = vpop.xlane.xlu0 %796
          %v798 = vsel %vm669, %v790, 0.0
          %799 = vadd.xlane.f32.xlu0 %v798
          %v800 = vpop.xlane.xlu0 %799
          %v801 = vsel %vm669, %v792, 0.0
          %802 = vadd.xlane.f32.xlu0 %v801
          %v803 = vpop.xlane.xlu0 %802
          %v804 = vsel %vm669, %v794, 0.0
          %805 = vadd.xlane.f32.xlu0 %v804
          %v806 = vpop.xlane.xlu0 %805
          %v807 = vld [vmem:[%s291] sm:$0xff]
          %v808 = vld [vmem:[%s291 + $0x8] sm:$0xff]
          %v809 = vld [vmem:[%s291 + $0x10] sm:$0xff]
          %v810 = vld [vmem:[%s291 + $0x18] sm:$0xff]
          %v811 = vld [vmem:[%s291 + $0x20] sm:$0xff]
          %v812 = vld [vmem:[%s291 + $0x28] sm:$0xff]
          %v813 = vld [vmem:[%s291 + $0x30] sm:$0xff]
          %v814 = vld [vmem:[%s291 + $0x38] sm:$0xff]
          %v815 = vmul.f32 %v807, %v797
          %v816 = vmul.f32 %v808, %v797
          %v817 = vmul.f32 %v809, %v800
          %v818 = vmul.f32 %v810, %v800
          %v819 = vmul.f32 %v811, %v803
          %v820 = vmul.f32 %v812, %v803
          %v821 = vmul.f32 %v813, %v806
          %v822 = vmul.f32 %v814, %v806
          %823 = vst [vmem:[%s291] sm:$0xff] %v815
          %824 = vst [vmem:[%s291 + $0x8] sm:$0xff] %v816
          %825 = vst [vmem:[%s291 + $0x10] sm:$0xff] %v817
          %826 = vst [vmem:[%s291 + $0x18] sm:$0xff] %v818
          %827 = vst [vmem:[%s291 + $0x20] sm:$0xff] %v819
          %828 = vst [vmem:[%s291 + $0x28] sm:$0xff] %v820
          %829 = vst [vmem:[%s291 + $0x30] sm:$0xff] %v821
          %830 = vst [vmem:[%s291 + $0x38] sm:$0xff] %v822
        $region60: #{tpu_custom_call.1} parent=47 // pred_fallthru
          _
        %s831 = sand.u32 %s195, 1
        %s832 = scalar_lea.sflag [#allocation5], %s831
        %s833 = sand.u32 %s195, 1
        %s834 = smul.addr %s833, 64
        %s835 = scalar_lea.vmem [#allocation4], %s834
        // Predicated region
        $region61: #{tpu_custom_call.1} parent=47 // pred_check
          %p836 = pneg %p205
        $region62: #{tpu_custom_call.1} parent=47 // pred_check_branch
          %838 = sbr.rel (%p836) target = $region64
        $region63: #{tpu_custom_call.1} parent=47 // pred_region
          %s840 = ssub.s32 1024, 1024
          %841 = vsyncadd %s832, %s840
          %s842 = smul.addr %s25, 8
          %s843 = smul.addr %s842, 128
          %s844 = scalar_lea.hbm %s7, %s843
          %s845 = sshll.u32 %s835, 4
          %s846 = int_to_ptr.vmem [resolvable:$true] %s845
          %851 = dma.vmem_to_hbm [thread:$0]  %s846, 1024, %s844, %s832, 256, 256, 16
        $region64: #{tpu_custom_call.1} parent=47 // pred_fallthru
          _
      $region48: #{tpu_custom_call.1} parent=5 // pred_fallthru
        _
      %p852 = scmp.le.s32.totalorder 2, %s16
      // Predicated region
      $region65: #{tpu_custom_call.1} parent=5 // pred_check
        %p853 = pneg %p852
      $region66: #{tpu_custom_call.1} parent=5 // pred_check_branch
        %855 = sbr.rel (%p853) target = $region68
      $region67: #{tpu_custom_call.1} parent=5 // pred_region
        %s856 = ssub.s32 %s16, 2
        // Predicated region
        $region69: #{tpu_custom_call.1} parent=67 // pred_check
          %p857 = pneg %p211
        $region70: #{tpu_custom_call.1} parent=67 // pred_check_branch
          %859 = sbr.rel (%p857) target = $region72
        $region71: #{tpu_custom_call.1} parent=67 // pred_region
          %s860 = sand.u32 %s196, 1
          %s861 = scalar_lea.sflag [#allocation5], %s860
          %s862 = sand.u32 %s196, 1
          %s863 = smul.addr %s862, 64
          %s864 = scalar_lea.vmem [#allocation4], %s863
          %865 = dma.done %s861, 1024
        $region72: #{tpu_custom_call.1} parent=67 // pred_fallthru
          _
      $region68: #{tpu_custom_call.1} parent=5 // pred_fallthru
        _
    $region6: #{tpu_custom_call.1} parent=1 // loop_footer
      %s20 = sadd.s32 1, %s16
    $region7: #{tpu_custom_call.1} parent=1 // loop_footer_branch
      %15 = sbr.rel target = $region3
    $region8: #{tpu_custom_call.1} parent=1 // loop_exit
      _
    %866 = vsyncpa [#allocation5], 1
    %s867 = scalar_lea.sflag [#allocation5], 1
    %868 = vsyncpa %s867, 1

</llo_original>
